<compile_context>
chip_gen: v6e
topology: v6e:2x2x1
jax: 0.10.0
libtpu: 0.0.40
codegen_flags: <defaults>
</compile_context>

<pallas_src>
import functools

import jax
import jax.numpy as jnp
from jax.experimental import pallas as pl
from jax.experimental.pallas import tpu as pltpu

_LANE = 128
_SUBLANE = 8
_MAX_TILE_B = 2048                     # rows per batch tile (amortize grid step cost)
_VMEM_LIMIT = 32 * 1024 * 1024         # safe on v5e/v6e (128 MiB) and v7x (64 MiB)


def _round_up(x, m):
    return ((x + m - 1) // m) * m


def _batch_tiling(batch):
    """Pick a sublane-aligned batch tile and the padded batch size.

    Tiles are as large as possible (<= _MAX_TILE_B) to amortize per-grid-step
    overhead; whenever more than one sublane-row of work exists we force at
    least 2 tiles so dimension_semantics=("parallel",) shards the batch axis
    across both TensorCores on v7x.
    """
    bp = _round_up(batch, _SUBLANE)
    n_tiles = max(-(-bp // _MAX_TILE_B), 2 if bp > _SUBLANE else 1)
    tile = _round_up(-(-bp // n_tiles), _SUBLANE)
    return tile, tile * n_tiles


def _pad2(a, rows, cols):
    return jnp.pad(a, ((0, rows - a.shape[0]), (0, cols - a.shape[1])))


def _device_kind():
    try:
        return jax.devices()[0].device_kind.lower()
    except Exception:  # no accelerator visible at construction time
        return ""


def _is_v6_or_newer():
    kind = _device_kind()
    return any(tag in kind for tag in ("v6", "v7"))


# ----------------------------- Pallas kernels ------------------------------ #

def _mlp3_kernel(x_ref, w1_ref, b1_ref, w2_ref, b2_ref, w3_ref, b3_ref,
                 out_ref, *, tanh_dtype):
    """tanh -> tanh -> linear MLP on one batch tile.

    Used for (a) the hard-shared trunk with merged actor/critic head and
    (b) the merged separate-parameter network (concat layer-1, block-diagonal
    layer-2, stacked layer-3 heads).  Matmuls accumulate in f32; tanh runs in
    `tanh_dtype` (bf16 on v6e/v7x when params are bf16, f32 otherwise);
    activations are kept in the weight dtype for the MXU.
    """
    cd = w1_ref.dtype
    h1 = jnp.tanh(
        (jnp.dot(x_ref[...], w1_ref[...], preferred_element_type=jnp.float32)
         + b1_ref[...]).astype(tanh_dtype)).astype(cd)
    h2 = jnp.tanh(
        (jnp.dot(h1, w2_ref[...], preferred_element_type=jnp.float32)
         + b2_ref[...]).astype(tanh_dtype)).astype(cd)
    out_ref[...] = (
        jnp.dot(h2, w3_ref[...], preferred_element_type=jnp.float32)
        + b3_ref[...]).astype(out_ref.dtype)


def _sep_split_kernel(x_ref, w1_ref, b1_ref, w2a_ref, b2a_ref, w2c_ref,
                      b2c_ref, w3a_ref, w3c_ref, b3_ref, out_ref, *,
                      tanh_dtype):
    """Fused Actor_Net + Critic_Net forward with split layer-2 (v5e path).

    Layer 1 is a single matmul against [actor_W1 | critic_W1]; the result is
    split at the 128-lane boundary for the two hp x hp layer-2 matmuls; the
    two layer-3 head matmuls are summed into one lane-dense output slab
    (actor head cols [0:act_dim], critic head col act_dim).
    """
    cd = w1_ref.dtype
    hp = w2a_ref.shape[0]
    h1 = jnp.tanh(
        (jnp.dot(x_ref[...], w1_ref[...], preferred_element_type=jnp.float32)
         + b1_ref[...]).astype(tanh_dtype)).astype(cd)
    h1a = h1[:, :hp]
    h1c = h1[:, hp:]
    h2a = jnp.tanh(
        (jnp.dot(h1a, w2a_ref[...], preferred_element_type=jnp.float32)
         + b2a_ref[...]).astype(tanh_dtype)).astype(cd)
    h2c = jnp.tanh(
        (jnp.dot(h1c, w2c_ref[...], preferred_element_type=jnp.float32)
         + b2c_ref[...]).astype(tanh_dtype)).astype(cd)
    out_ref[...] = (
        jnp.dot(h2a, w3a_ref[...], preferred_element_type=jnp.float32)
        + jnp.dot(h2c, w3c_ref[...], preferred_element_type=jnp.float32)
        + b3_ref[...]).astype(out_ref.dtype)


# ----------------------------- wrappers ------------------------------------ #

@functools.partial(jax.jit, static_argnames=("act_dim", "tanh_dtype"))
def mlp3_forward(x, w1, b1, w2, b2, w3, b3, act_dim, tanh_dtype):
    batch, obs_dim = x.shape
    n1 = w1.shape[1]           # hp (hardshare) or 2*hp (merged sep)
    np_out = w3.shape[1]
    tile_b, bpad = _batch_tiling(batch)
    grid = (bpad // tile_b,)
    # Only batch-dim padding; x keeps its native feature width (no 8x lane pad).
    xp = jnp.pad(x, ((0, bpad - batch), (0, 0))).astype(w1.dtype)

    wbytes = sum(int(a.size) * a.dtype.itemsize
                 for a in (w1, b1, w2, b2, w3, b3))
    flops = 2 * bpad * (obs_dim * n1 + n1 * n1 + n1 * np_out)

    out = pl.pallas_call(
        functools.partial(_mlp3_kernel, tanh_dtype=tanh_dtype),
        out_shape=jax.ShapeDtypeStruct((bpad, np_out), jnp.float32),
        grid=grid,
        in_specs=[
            pl.BlockSpec((tile_b, obs_dim), lambda i: (i, 0)),   # x (batch-tiled)
            pl.BlockSpec((obs_dim, n1), lambda i: (0, 0)),       # W1
            pl.BlockSpec((1, n1), lambda i: (0, 0)),             # b1
            pl.BlockSpec((n1, n1), lambda i: (0, 0)),            # W2
            pl.BlockSpec((1, n1), lambda i: (0, 0)),             # b2
            pl.BlockSpec((n1, np_out), lambda i: (0, 0)),        # W3 (merged heads)
            pl.BlockSpec((1, np_out), lambda i: (0, 0)),         # b3
        ],
        out_specs=pl.BlockSpec((tile_b, np_out), lambda i: (i, 0)),
        compiler_params=pltpu.CompilerParams(
            dimension_semantics=("parallel",),
            vmem_limit_bytes=_VMEM_LIMIT),
        cost_estimate=pl.CostEstimate(
            flops=flops,
            transcendentals=2 * bpad * n1,
            bytes_accessed=int(xp.size) * xp.dtype.itemsize + wbytes
            + bpad * np_out * 4),
    )(xp, w1, b1, w2, b2, w3, b3)

    out = out[:batch]
    return out[:, :act_dim], out[:, act_dim:act_dim + 1]


@functools.partial(jax.jit, static_argnames=("act_dim", "tanh_dtype"))
def sep_split_forward(x, w1, b1, w2a, b2a, w2c, b2c, w3a, w3c, b3, act_dim,
                      tanh_dtype):
    batch, obs_dim = x.shape
    hp2 = w1.shape[1]
    hp = w2a.shape[0]
    np_out = w3a.shape[1]
    tile_b, bpad = _batch_tiling(batch)
    grid = (bpad // tile_b,)
    xp = jnp.pad(x, ((0, bpad - batch), (0, 0))).astype(w1.dtype)

    wbytes = sum(int(a.size) * a.dtype.itemsize
                 for a in (w1, b1, w2a, b2a, w2c, b2c, w3a, w3c, b3))
    flops = 2 * bpad * (obs_dim * hp2 + 2 * hp * hp + 2 * hp * np_out)

    out = pl.pallas_call(
        functools.partial(_sep_split_kernel, tanh_dtype=tanh_dtype),
        out_shape=jax.ShapeDtypeStruct((bpad, np_out), jnp.float32),
        grid=grid,
        in_specs=[
            pl.BlockSpec((tile_b, obs_dim), lambda i: (i, 0)),   # x (batch-tiled)
            pl.BlockSpec((obs_dim, hp2), lambda i: (0, 0)),      # [a_W1 | c_W1]
            pl.BlockSpec((1, hp2), lambda i: (0, 0)),            # [a_b1 | c_b1]
            pl.BlockSpec((hp, hp), lambda i: (0, 0)),            # a_W2
            pl.BlockSpec((1, hp), lambda i: (0, 0)),             # a_b2
            pl.BlockSpec((hp, hp), lambda i: (0, 0)),            # c_W2
            pl.BlockSpec((1, hp), lambda i: (0, 0)),             # c_b2
            pl.BlockSpec((hp, np_out), lambda i: (0, 0)),        # a_W3 (padded slab)
            pl.BlockSpec((hp, np_out), lambda i: (0, 0)),        # c_W3 (padded slab)
            pl.BlockSpec((1, np_out), lambda i: (0, 0)),         # merged b3
        ],
        out_specs=pl.BlockSpec((tile_b, np_out), lambda i: (i, 0)),
        compiler_params=pltpu.CompilerParams(
            dimension_semantics=("parallel",),
            vmem_limit_bytes=_VMEM_LIMIT),
        cost_estimate=pl.CostEstimate(
            flops=flops,
            transcendentals=4 * bpad * hp,
            bytes_accessed=int(xp.size) * xp.dtype.itemsize + wbytes
            + bpad * np_out * 4),
    )(xp, w1, b1, w2a, b2a, w2c, b2c, w3a, w3c, b3)

    out = out[:batch]
    return out[:, :act_dim], out[:, act_dim:act_dim + 1]


# ----------------------- deterministic parameter init ---------------------- #

def layer_init_raw(key, in_dim, out_dim, std):
    """Matches layer_init(): orthogonal weight (gain=std), zero bias.
    Weight drawn in PyTorch's (out, in) shape, returned transposed (in, out)."""
    w = jax.nn.initializers.orthogonal(scale=std)(key, (out_dim, in_dim),
                                                  jnp.float32)
    b = jnp.zeros((out_dim,), jnp.float32)
    return jnp.asarray(w.T), b


class ActorCriticNet:
    """JAX/Pallas re-implementation of Actor_Critic_net.forward().

    Weights are zero-padded / merged into lane-aligned (multiple-of-128)
    slabs once at init time so the kernels see only dense, aligned tiles.
    `param_dtype=jnp.bfloat16` stores weights/activations in bf16 (f32
    accumulation) and is recommended on every TPU generation; default f32
    is exact.  `merge_layer2` (sep branch only) defaults to True on v6e/v7x
    (block-diagonal layer-2 fills the 256-wide MXU) and False on v5e.
    """

    def __init__(self, obs_dim, act_dim, hidden_dim, continous_action,
                 parameters_hardshare, log_std_init=0.0, *, key,
                 param_dtype=jnp.float32, merge_layer2=None):
        self.parameters_hardshare = parameters_hardshare
        self.continous_action = continous_action
        self.action_dim = act_dim
        pd = param_dtype
        sqrt2 = float(jnp.sqrt(2.0))

        hp = _round_up(hidden_dim, _LANE)
        np_out = _round_up(act_dim + 1, _LANE)

        # bf16 tanh only where the EUP supports it (v6e/v7x); f32 elsewhere.
        self.tanh_dtype = (jnp.bfloat16
                           if (pd == jnp.bfloat16 and _is_v6_or_newer())
                           else jnp.float32)
        if merge_layer2 is None:
            merge_layer2 = _is_v6_or_newer()
        self.merge_layer2 = bool(merge_layer2)

        ks = jax.random.split(key, 8)
        if parameters_hardshare:
            w1, b1 = layer_init_raw(ks[0], obs_dim, hidden_dim, sqrt2)
            w2, b2 = layer_init_raw(ks[1], hidden_dim, hidden_dim, sqrt2)
            wa, ba = layer_init_raw(ks[2], hidden_dim, act_dim, 0.01)
            wc, bc = layer_init_raw(ks[3], hidden_dim, 1, 1.0)
            self.raw = dict(w1=w1, b1=b1, w2=w2, b2=b2, wa=wa, ba=ba,
                            wc=wc, bc=bc)
            # x is no longer lane-padded, so W1 keeps obs_dim rows.
            self.w1 = _pad2(w1, obs_dim, hp).astype(pd)
            self.b1 = _pad2(b1[None, :], 1, hp)
            self.w2 = _pad2(w2, hp, hp).astype(pd)
            self.b2 = _pad2(b2[None, :], 1, hp)
            wh = jnp.zeros((hp, np_out), jnp.float32)
            wh = wh.at[:hidden_dim, :act_dim].set(wa)
            wh = wh.at[:hidden_dim, act_dim:act_dim + 1].set(wc)
            self.wh = wh.astype(pd)
            bh = jnp.zeros((1, np_out), jnp.float32)
            bh = bh.at[0, :act_dim].set(ba)
            bh = bh.at[0, act_dim].set(bc[0])
            self.bh = bh
        else:
            a_w1, a_b1 = layer_init_raw(ks[0], obs_dim, hidden_dim, sqrt2)
            a_w2, a_b2 = layer_init_raw(ks[1], hidden_dim, hidden_dim, sqrt2)
            a_w3, a_b3 = layer_init_raw(ks[2], hidden_dim, act_dim, 0.01)
            c_w1, c_b1 = layer_init_raw(ks[3], obs_dim, hidden_dim, sqrt2)
            c_w2, c_b2 = layer_init_raw(ks[4], hidden_dim, hidden_dim, sqrt2)
            c_w3, c_b3 = layer_init_raw(ks[5], hidden_dim, 1, 1.0)
            self.raw = dict(a_w1=a_w1, a_b1=a_b1, a_w2=a_w2, a_b2=a_b2,
                            a_w3=a_w3, a_b3=a_b3, c_w1=c_w1, c_b1=c_b1,
                            c_w2=c_w2, c_b2=c_b2, c_w3=c_w3, c_b3=c_b3)
            # Layer 1: [actor | critic] along the output axis (always merged).
            w1cat = jnp.zeros((obs_dim, 2 * hp), jnp.float32)
            w1cat = w1cat.at[:, :hidden_dim].set(a_w1)
            w1cat = w1cat.at[:, hp:hp + hidden_dim].set(c_w1)
            self.w1 = w1cat.astype(pd)
            b1cat = jnp.zeros((1, 2 * hp), jnp.float32)
            b1cat = b1cat.at[0, :hidden_dim].set(a_b1)
            b1cat = b1cat.at[0, hp:hp + hidden_dim].set(c_b1)
            self.b1 = b1cat
            # Merged layer-3 bias (actor cols [0:act_dim], critic col act_dim).
            b3 = jnp.zeros((1, np_out), jnp.float32)
            b3 = b3.at[0, :act_dim].set(a_b3)
            b3 = b3.at[0, act_dim].set(c_b3[0])
            self.b3 = b3
            if self.merge_layer2:
                # Block-diagonal layer 2 + vertically stacked layer-3 heads ->
                # the sep branch reuses the same 3-matmul kernel as hardshare.
                w2bd = jnp.zeros((2 * hp, 2 * hp), jnp.float32)
                w2bd = w2bd.at[:hidden_dim, :hidden_dim].set(a_w2)
                w2bd = w2bd.at[hp:hp + hidden_dim, hp:hp + hidden_dim].set(c_w2)
                self.w2 = w2bd.astype(pd)
                b2cat = jnp.zeros((1, 2 * hp), jnp.float32)
                b2cat = b2cat.at[0, :hidden_dim].set(a_b2)
                b2cat = b2cat.at[0, hp:hp + hidden_dim].set(c_b2)
                self.b2 = b2cat
                w3 = jnp.zeros((2 * hp, np_out), jnp.float32)
                w3 = w3.at[:hidden_dim, :act_dim].set(a_w3)
                w3 = w3.at[hp:hp + hidden_dim, act_dim:act_dim + 1].set(c_w3)
                self.w3 = w3.astype(pd)
            else:
                self.w2a = _pad2(a_w2, hp, hp).astype(pd)
                self.b2a = _pad2(a_b2[None, :], 1, hp)
                self.w2c = _pad2(c_w2, hp, hp).astype(pd)
                self.b2c = _pad2(c_b2[None, :], 1, hp)
                w3a = jnp.zeros((hp, np_out), jnp.float32)
                w3a = w3a.at[:hidden_dim, :act_dim].set(a_w3)
                self.w3a = w3a.astype(pd)
                w3c = jnp.zeros((hp, np_out), jnp.float32)
                w3c = w3c.at[:hidden_dim, act_dim:act_dim + 1].set(c_w3)
                self.w3c = w3c.astype(pd)
        if continous_action:
            self.log_std = jnp.full((act_dim,), log_std_init, jnp.float32)

    def forward(self, x):
        if self.parameters_hardshare:
            return mlp3_forward(x, self.w1, self.b1, self.w2, self.b2,
                                self.wh, self.bh, act_dim=self.action_dim,
                                tanh_dtype=self.tanh_dtype)
        if self.merge_layer2:
            return mlp3_forward(x, self.w1, self.b1, self.w2, self.b2,
                                self.w3, self.b3, act_dim=self.action_dim,
                                tanh_dtype=self.tanh_dtype)
        return sep_split_forward(x, self.w1, self.b1, self.w2a, self.b2a,
                                 self.w2c, self.b2c, self.w3a, self.w3c,
                                 self.b3, act_dim=self.action_dim,
                                 tanh_dtype=self.tanh_dtype)


# ----------------------------- reference (pure JAX) ------------------------ #

def _ref_mlp3(x, w1, b1, w2, b2, w3, b3):
    h1 = jnp.tanh(x @ w1 + b1)
    h2 = jnp.tanh(h1 @ w2 + b2)
    return h2 @ w3 + b3


# ----------------------------------- main ----------------------------------- #

if __name__ == "__main__":
    key = jax.random.PRNGKey(0)
    k_params, k_x, k_x2 = jax.random.split(key, 3)

    batch, obs_dim, act_dim, hidden_dim = 8, 16, 4, 32
    x = jax.random.normal(k_x, (batch, obs_dim), jnp.float32)

    # -- parameters_hardshare = True (fused trunk + merged heads) ----------- #
    net_hs = ActorCriticNet(obs_dim, act_dim, hidden_dim,
                            continous_action=False, parameters_hardshare=True,
                            key=k_params)
    logits_hs, value_hs = net_hs.forward(x)
    jax.block_until_ready((logits_hs, value_hs))

    r = net_hs.raw
    h2 = jnp.tanh(jnp.tanh(x @ r["w1"] + r["b1"]) @ r["w2"] + r["b2"])
    ref_logits_hs = h2 @ r["wa"] + r["ba"]
    ref_value_hs = h2 @ r["wc"] + r["bc"]
    assert logits_hs.shape == (batch, act_dim) and value_hs.shape == (batch, 1)
    assert jnp.allclose(logits_hs, ref_logits_hs, atol=1e-5, rtol=1e-5)
    assert jnp.allclose(value_hs, ref_value_hs, atol=1e-5, rtol=1e-5)

    # -- parameters_hardshare = False, merged layer-2 kernel (v6e/v7x path) - #
    net_sep_m = ActorCriticNet(obs_dim, act_dim, hidden_dim,
                               continous_action=True,
                               parameters_hardshare=False, key=k_params,
                               merge_layer2=True)
    logits_m, value_m = net_sep_m.forward(x)
    jax.block_until_ready((logits_m, value_m))

    r = net_sep_m.raw
    ref_logits_sep = _ref_mlp3(x, r["a_w1"], r["a_b1"], r["a_w2"], r["a_b2"],
                               r["a_w3"], r["a_b3"])
    ref_value_sep = _ref_mlp3(x, r["c_w1"], r["c_b1"], r["c_w2"], r["c_b2"],
                              r["c_w3"], r["c_b3"])
    assert logits_m.shape == (batch, act_dim) and value_m.shape == (batch, 1)
    assert jnp.allclose(logits_m, ref_logits_sep, atol=1e-5, rtol=1e-5)
    assert jnp.allclose(value_m, ref_value_sep, atol=1e-5, rtol=1e-5)

    # -- parameters_hardshare = False, split layer-2 kernel (v5e path) ------ #
    net_sep_s = ActorCriticNet(obs_dim, act_dim, hidden_dim,
                               continous_action=True,
                               parameters_hardshare=False, key=k_params,
                               merge_layer2=False)
    logits_s, value_s = net_sep_s.forward(x)
    jax.block_until_ready((logits_s, value_s))
    assert jnp.allclose(logits_s, ref_logits_sep, atol=1e-5, rtol=1e-5)
    assert jnp.allclose(value_s, ref_value_sep, atol=1e-5, rtol=1e-5)

    # -- larger batch: exercises multi-tile grid + batch padding slice ------ #
    big_batch = 600
    x_big = jax.random.normal(k_x2, (big_batch, obs_dim), jnp.float32)
    logits_big, value_big = net_sep_m.forward(x_big)
    jax.block_until_ready((logits_big, value_big))
    ref_logits_big = _ref_mlp3(x_big, r["a_w1"], r["a_b1"], r["a_w2"],
                               r["a_b2"], r["a_w3"], r["a_b3"])
    ref_value_big = _ref_mlp3(x_big, r["c_w1"], r["c_b1"], r["c_w2"],
                              r["c_b2"], r["c_w3"], r["c_b3"])
    assert logits_big.shape == (big_batch, act_dim)
    assert value_big.shape == (big_batch, 1)
    assert jnp.allclose(logits_big, ref_logits_big, atol=1e-4, rtol=1e-4)
    assert jnp.allclose(value_big, ref_value_big, atol=1e-4, rtol=1e-4)

    # -- bf16 weight/activation storage (f32 accumulation), loose tolerance - #
    net_bf16 = ActorCriticNet(obs_dim, act_dim, hidden_dim,
                              continous_action=False,
                              parameters_hardshare=True, key=k_params,
                              param_dtype=jnp.bfloat16)
    logits_b, value_b = net_bf16.forward(x)
    jax.block_until_ready((logits_b, value_b))
    rb = net_bf16.raw
    h2b = jnp.tanh(jnp.tanh(x @ rb["w1"] + rb["b1"]) @ rb["w2"] + rb["b2"])
    assert jnp.allclose(logits_b, h2b @ rb["wa"] + rb["ba"], atol=0.1, rtol=0.1)
    assert jnp.allclose(value_b, h2b @ rb["wc"] + rb["bc"], atol=0.1, rtol=0.1)

    print("KERNEL_OK")
</pallas_src>

<mosaic_0001>
module attributes {stable_mosaic.version = 11 : i64} {
  func.func @_mlp3_kernel(%arg0: i32, %arg1: memref<8x16xf32, #tpu.memory_space<vmem>>, %arg2: memref<16x128xf32, #tpu.memory_space<vmem>>, %arg3: memref<1x128xf32, #tpu.memory_space<vmem>>, %arg4: memref<128x128xf32, #tpu.memory_space<vmem>>, %arg5: memref<1x128xf32, #tpu.memory_space<vmem>>, %arg6: memref<128x128xf32, #tpu.memory_space<vmem>>, %arg7: memref<1x128xf32, #tpu.memory_space<vmem>>, %arg8: memref<8x128xf32, #tpu.memory_space<vmem>>) attributes {dimension_semantics = [#tpu.dimension_semantics<parallel>], iteration_bounds = array<i64: 1>, scalar_prefetch = 0 : i64, scratch_operands = 0 : i64, tpu.core_type = #tpu.core_type<tc>, window_params = [{transform_indices = @transform_0, window_bounds = array<i64: 8, 16>}, {pipeline_mode = #tpu.pipeline_mode<synchronous>, transform_indices = @transform_1, window_bounds = array<i64: 16, 128>}, {pipeline_mode = #tpu.pipeline_mode<synchronous>, transform_indices = @transform_2, window_bounds = array<i64: 1, 128>}, {pipeline_mode = #tpu.pipeline_mode<synchronous>, transform_indices = @transform_3, window_bounds = array<i64: 128, 128>}, {pipeline_mode = #tpu.pipeline_mode<synchronous>, transform_indices = @transform_4, window_bounds = array<i64: 1, 128>}, {pipeline_mode = #tpu.pipeline_mode<synchronous>, transform_indices = @transform_5, window_bounds = array<i64: 128, 128>}, {pipeline_mode = #tpu.pipeline_mode<synchronous>, transform_indices = @transform_6, window_bounds = array<i64: 1, 128>}, {transform_indices = @transform_7, window_bounds = array<i64: 8, 128>}]} {
    %c0 = arith.constant 0 : index
    %c0_0 = arith.constant 0 : index
    %0 = vector.load %arg1[%c0, %c0_0] : memref<8x16xf32, #tpu.memory_space<vmem>>, vector<8x16xf32>
    %c0_1 = arith.constant 0 : index
    %c0_2 = arith.constant 0 : index
    %1 = vector.load %arg2[%c0_1, %c0_2] : memref<16x128xf32, #tpu.memory_space<vmem>>, vector<16x128xf32>
    %cst = arith.constant dense<0.000000e+00> : vector<8x128xf32>
    %2 = tpu.matmul %0, %1, %cst {dimension_numbers = #tpu.dot_dimension_numbers<[1], [0], [0], [1], [0, 0, 1, 1], [], []>} : vector<8x16xf32>, vector<16x128xf32>, vector<8x128xf32> -> vector<8x128xf32>
    %c0_3 = arith.constant 0 : index
    %c0_4 = arith.constant 0 : index
    %3 = vector.load %arg3[%c0_3, %c0_4] : memref<1x128xf32, #tpu.memory_space<vmem>>, vector<1x128xf32>
    %4 = vector.broadcast %3 : vector<1x128xf32> to vector<8x128xf32>
    %5 = arith.addf %2, %4 : vector<8x128xf32>
    %6 = math.tanh %5 : vector<8x128xf32>
    %c0_5 = arith.constant 0 : index
    %c0_6 = arith.constant 0 : index
    %7 = vector.load %arg4[%c0_5, %c0_6] : memref<128x128xf32, #tpu.memory_space<vmem>>, vector<128x128xf32>
    %cst_7 = arith.constant dense<0.000000e+00> : vector<8x128xf32>
    %8 = tpu.matmul %6, %7, %cst_7 {dimension_numbers = #tpu.dot_dimension_numbers<[1], [0], [0], [1], [0, 0, 1, 1], [], []>} : vector<8x128xf32>, vector<128x128xf32>, vector<8x128xf32> -> vector<8x128xf32>
    %c0_8 = arith.constant 0 : index
    %c0_9 = arith.constant 0 : index
    %9 = vector.load %arg5[%c0_8, %c0_9] : memref<1x128xf32, #tpu.memory_space<vmem>>, vector<1x128xf32>
    %10 = vector.broadcast %9 : vector<1x128xf32> to vector<8x128xf32>
    %11 = arith.addf %8, %10 : vector<8x128xf32>
    %12 = math.tanh %11 : vector<8x128xf32>
    %c0_10 = arith.constant 0 : index
    %c0_11 = arith.constant 0 : index
    %13 = vector.load %arg6[%c0_10, %c0_11] : memref<128x128xf32, #tpu.memory_space<vmem>>, vector<128x128xf32>
    %cst_12 = arith.constant dense<0.000000e+00> : vector<8x128xf32>
    %14 = tpu.matmul %12, %13, %cst_12 {dimension_numbers = #tpu.dot_dimension_numbers<[1], [0], [0], [1], [0, 0, 1, 1], [], []>} : vector<8x128xf32>, vector<128x128xf32>, vector<8x128xf32> -> vector<8x128xf32>
    %c0_13 = arith.constant 0 : index
    %c0_14 = arith.constant 0 : index
    %15 = vector.load %arg7[%c0_13, %c0_14] : memref<1x128xf32, #tpu.memory_space<vmem>>, vector<1x128xf32>
    %16 = vector.broadcast %15 : vector<1x128xf32> to vector<8x128xf32>
    %17 = arith.addf %14, %16 : vector<8x128xf32>
    %c0_15 = arith.constant 0 : index
    %c0_16 = arith.constant 0 : index
    %18 = vector.load %arg8[%c0_15, %c0_16] : memref<8x128xf32, #tpu.memory_space<vmem>>, vector<8x128xf32>
    tpu.vector_store %arg8[%c0_15, %c0_16], %17 {strides = array<i32>} : memref<8x128xf32, #tpu.memory_space<vmem>>, vector<8x128xf32>,
    return
  }
  func.func @transform_0(%arg0: i32) -> (i32, i32) {
    %c0_i32 = arith.constant 0 : i32
    %c0_i32_0 = arith.constant 0 : i32
    return %arg0, %c0_i32 : i32, i32
  }
  func.func @transform_1(%arg0: i32) -> (i32, i32) {
    %c0_i32 = arith.constant 0 : i32
    %c0_i32_0 = arith.constant 0 : i32
    %c0_i32_1 = arith.constant 0 : i32
    return %c0_i32, %c0_i32_0 : i32, i32
  }
  func.func @transform_2(%arg0: i32) -> (i32, i32) {
    %c0_i32 = arith.constant 0 : i32
    %c0_i32_0 = arith.constant 0 : i32
    %c0_i32_1 = arith.constant 0 : i32
    return %c0_i32, %c0_i32_0 : i32, i32
  }
  func.func @transform_3(%arg0: i32) -> (i32, i32) {
    %c0_i32 = arith.constant 0 : i32
    %c0_i32_0 = arith.constant 0 : i32
    %c0_i32_1 = arith.constant 0 : i32
    return %c0_i32, %c0_i32_0 : i32, i32
  }
  func.func @transform_4(%arg0: i32) -> (i32, i32) {
    %c0_i32 = arith.constant 0 : i32
    %c0_i32_0 = arith.constant 0 : i32
    %c0_i32_1 = arith.constant 0 : i32
    return %c0_i32, %c0_i32_0 : i32, i32
  }
  func.func @transform_5(%arg0: i32) -> (i32, i32) {
    %c0_i32 = arith.constant 0 : i32
    %c0_i32_0 = arith.constant 0 : i32
    %c0_i32_1 = arith.constant 0 : i32
    return %c0_i32, %c0_i32_0 : i32, i32
  }
  func.func @transform_6(%arg0: i32) -> (i32, i32) {
    %c0_i32 = arith.constant 0 : i32
    %c0_i32_0 = arith.constant 0 : i32
    %c0_i32_1 = arith.constant 0 : i32
    return %c0_i32, %c0_i32_0 : i32, i32
  }
  func.func @transform_7(%arg0: i32) -> (i32, i32) {
    %c0_i32 = arith.constant 0 : i32
    %c0_i32_0 = arith.constant 0 : i32
    return %arg0, %c0_i32 : i32, i32
  }
}

</mosaic_0001>

<llo_original>
// kernel: mlp3_forward.1
$region0: #{mlp3_forward.1}
  #allocation0 [shape = 'u32[]', space=smem, size = 0x4, offset = 0x4, fixed_abs, tag = 'smem constant byte address 0x4 - core index']
  #allocation1 [shape = 'u32[144,128]{1,0:T(1,128)}', space=vmem, size = 0x12000, scoped, tag = 'internal scratch']
  %s0 = inlined_call_operand.hbm [shape: f32[8,16], index: 0, kind: input, shape index: {}]
  %s1 = inlined_call_operand.hbm [shape: f32[16,128], index: 1, kind: input, shape index: {}]
  %s2 = inlined_call_operand.vmem [shape: f32[1,128], index: 2, kind: input, shape index: {}]
  %s3 = inlined_call_operand.hbm [shape: f32[128,128], index: 3, kind: input, shape index: {}]
  %s4 = inlined_call_operand.vmem [shape: f32[1,128], index: 4, kind: input, shape index: {}]
  %s5 = inlined_call_operand.hbm [shape: f32[128,128], index: 5, kind: input, shape index: {}]
  %s6 = inlined_call_operand.vmem [shape: f32[1,128], index: 6, kind: input, shape index: {}]
  %s7 = inlined_call_operand.vmem [shape: f32[8,128], index: 7, kind: output, shape index: {}]
  %s8 = sld [smem:[#allocation0]]
  $region54: #{mlp3_forward.1} parent=0
    _
  %s10 = ssub.s32 1, %s8
  %s11 = scalar_select 0, %s10, %s8
  $region1: #{mlp3_forward.1} parent=0
    #allocation2 [shape = 'u8[4096]{0}', space=vmem, size = 0x1000, scoped, tag = 'input window, operand 0, single buffered']
    #allocation3 [shape = 's32[1]{0}', space=sflag, size = 0x4, scoped, tag = 'scoped memory for mlp3_forward.1']
    #allocation4 [shape = 'u8[8192]{0}', space=vmem, size = 0x2000, scoped, tag = 'input window, operand 1, single buffered']
    #allocation5 [shape = 's32[1]{0}', space=sflag, size = 0x4, scoped, tag = 'scoped memory for mlp3_forward.1']
    #allocation6 [shape = 'u8[65536]{0}', space=vmem, size = 0x10000, scoped, tag = 'input window, operand 3, single buffered']
    #allocation7 [shape = 'u8[65536]{0}', space=vmem, size = 0x10000, scoped, tag = 'input window, operand 5, single buffered']
    #allocation8 [shape = 's32[1]{0}', space=sflag, size = 0x4, scoped, tag = 'scoped memory for mlp3_forward.1']
    %12 = vsyncpa [#allocation3], 0
    %13 = vsyncpa [#allocation5], 0
    %14 = vsyncpa [#allocation8], 0
    // Predicated region
    $region2: #{mlp3_forward.1} parent=1 // pred_check
      _
    $region3: #{mlp3_forward.1} parent=1 // pred_check_branch
      %16 = sbr.rel (0) target = $region5
    $region4: #{mlp3_forward.1} parent=1 // pred_region
      %s18 = ssub.s32 128, 128
      %19 = vsyncadd [#allocation3], %s18
      %s21 = sshll.u32 [#allocation2], 4
      %s22 = int_to_ptr.vmem [resolvable:$true] %s21
      %24 = dma.hbm_to_vmem [thread:$0]  %s0, 128, %s22, [#allocation3]
    $region5: #{mlp3_forward.1} parent=1 // pred_fallthru
      _
    // Predicated region
    $region6: #{mlp3_forward.1} parent=1 // pred_check
      _
    $region7: #{mlp3_forward.1} parent=1 // pred_check_branch
      %26 = sbr.rel (0) target = $region9
    $region8: #{mlp3_forward.1} parent=1 // pred_region
      %s28 = ssub.s32 256, 256
      %29 = vsyncadd [#allocation5], %s28
      %s30 = sshll.u32 [#allocation4], 4
      %s31 = int_to_ptr.vmem [resolvable:$true] %s30
      %36 = dma.hbm_to_vmem [thread:$0]  %s1, 256, %s31, [#allocation5], 128, 128, 8
    $region9: #{mlp3_forward.1} parent=1 // pred_fallthru
      _
    // Predicated region
    $region10: #{mlp3_forward.1} parent=1 // pred_check
      _
    $region11: #{mlp3_forward.1} parent=1 // pred_check_branch
      %38 = sbr.rel (0) target = $region13
    $region12: #{mlp3_forward.1} parent=1 // pred_region
      _
    $region13: #{mlp3_forward.1} parent=1 // pred_fallthru
      _
    // Predicated region
    $region14: #{mlp3_forward.1} parent=1 // pred_check
      _
    $region15: #{mlp3_forward.1} parent=1 // pred_check_branch
      %40 = sbr.rel (0) target = $region17
    $region16: #{mlp3_forward.1} parent=1 // pred_region
      %s42 = ssub.s32 2048, 2048
      %43 = vsyncadd [#allocation5], %s42
      %s44 = sshll.u32 [#allocation6], 4
      %s45 = int_to_ptr.vmem [resolvable:$true] %s44
      %50 = dma.hbm_to_vmem [thread:$0]  %s3, 2048, %s45, [#allocation5], 128, 128, 8
    $region17: #{mlp3_forward.1} parent=1 // pred_fallthru
      _
    // Predicated region
    $region18: #{mlp3_forward.1} parent=1 // pred_check
      _
    $region19: #{mlp3_forward.1} parent=1 // pred_check_branch
      %52 = sbr.rel (0) target = $region21
    $region20: #{mlp3_forward.1} parent=1 // pred_region
      _
    $region21: #{mlp3_forward.1} parent=1 // pred_fallthru
      _
    // Predicated region
    $region22: #{mlp3_forward.1} parent=1 // pred_check
      _
    $region23: #{mlp3_forward.1} parent=1 // pred_check_branch
      %54 = sbr.rel (0) target = $region25
    $region24: #{mlp3_forward.1} parent=1 // pred_region
      %s56 = ssub.s32 2048, 2048
      %57 = vsyncadd [#allocation8], %s56
      %s58 = sshll.u32 [#allocation7], 4
      %s59 = int_to_ptr.vmem [resolvable:$true] %s58
      %64 = dma.hbm_to_vmem [thread:$0]  %s5, 2048, %s59, [#allocation8], 128, 128, 8
    $region25: #{mlp3_forward.1} parent=1 // pred_fallthru
      _
    // Predicated region
    $region26: #{mlp3_forward.1} parent=1 // pred_check
      _
    $region27: #{mlp3_forward.1} parent=1 // pred_check_branch
      %66 = sbr.rel (0) target = $region29
    $region28: #{mlp3_forward.1} parent=1 // pred_region
      _
    $region29: #{mlp3_forward.1} parent=1 // pred_fallthru
      _
    // Predicated region
    $region30: #{mlp3_forward.1} parent=1 // pred_check
      _
    $region31: #{mlp3_forward.1} parent=1 // pred_check_branch
      %68 = sbr.rel (0) target = $region33
    $region32: #{mlp3_forward.1} parent=1 // pred_region
      %69 = dma.done [#allocation3], 128
    $region33: #{mlp3_forward.1} parent=1 // pred_fallthru
      _
    // Predicated region
    $region34: #{mlp3_forward.1} parent=1 // pred_check
      _
    $region35: #{mlp3_forward.1} parent=1 // pred_check_branch
      %71 = sbr.rel (0) target = $region37
    $region36: #{mlp3_forward.1} parent=1 // pred_region
      %72 = dma.done [#allocation5], 256
    $region37: #{mlp3_forward.1} parent=1 // pred_fallthru
      _
    // Predicated region
    $region38: #{mlp3_forward.1} parent=1 // pred_check
      _
    $region39: #{mlp3_forward.1} parent=1 // pred_check_branch
      %74 = sbr.rel (0) target = $region41
    $region40: #{mlp3_forward.1} parent=1 // pred_region
      %75 = dma.done [#allocation5], 2048
    $region41: #{mlp3_forward.1} parent=1 // pred_fallthru
      _
    // Predicated region
    $region42: #{mlp3_forward.1} parent=1 // pred_check
      _
    $region43: #{mlp3_forward.1} parent=1 // pred_check_branch
      %77 = sbr.rel (0) target = $region45
    $region44: #{mlp3_forward.1} parent=1 // pred_region
      %78 = dma.done [#allocation8], 2048
    $region45: #{mlp3_forward.1} parent=1 // pred_fallthru
      _
    %v79 = vld [vmem:[#allocation2] sm:$0xff]
    %v80 = vld [vmem:[#allocation4] sm:$0xff]
    %v81 = vld [vmem:[#allocation4 + $0x8] sm:$0xff]
    %v82 = vld [vmem:[%s2] sm:$0x1]
    %v84 = vlaneseq
    %v85 = vshrl.u32 %v84, 7
    %v86 = vsub.s32 0, %v85
    %v87 = vrot.slane %v82, %v86
    %vm89 = vcmask 130048
    %v91 = vsel %vm89, %v79, 0
    %93 = vmatprep.subr.mxu0 0.0
    %94 = vmatpush1.msra.mxu0 0.0
    %95 = vmatprep.subr.mxu0 0.0
    %96 = vmatpush1.msra.mxu0 0.0
    %97 = vmatprep.subr.mxu0 0.0
    %98 = vmatpush1.msra.mxu0 0.0
    %99 = vmatprep.subr.mxu0 0.0
    %100 = vmatpush1.msra.mxu0 0.0
    %101 = vmatprep.subr.mxu0 0.0
    %102 = vmatpush1.msra.mxu0 0.0
    %103 = vmatprep.subr.mxu0 0.0
    %104 = vmatpush1.msra.mxu0 0.0
    %105 = vmatprep.subr.mxu0 0.0
    %106 = vmatpush1.msra.mxu0 0.0
    %107 = vmatprep.subr.mxu0 0.0
    %108 = vmatpush1.msra.mxu0 0.0
    %109 = vmatprep.subr.mxu0 0.0
    %110 = vmatpush1.msra.mxu0 0.0
    %111 = vmatprep.subr.mxu0 0.0
    %112 = vmatpush1.msra.mxu0 0.0
    %113 = vmatprep.subr.mxu0 0.0
    %114 = vmatpush1.msra.mxu0 0.0
    %115 = vmatprep.subr.mxu0 0.0
    %116 = vmatpush1.msra.mxu0 0.0
    %117 = vmatprep.subr.mxu0 0.0
    %118 = vmatpush1.msra.mxu0 0.0
    %119 = vmatprep.subr.mxu0 0.0
    %120 = vmatpush1.msra.mxu0 0.0
    %121 = vmatprep.subr.mxu0 0.0
    %122 = vmatpush1.msra.mxu0 %v81
    %123 = vmatprep.subr.mxu0 0.0
    %124 = vmatpush1.msra.mxu0 %v80
    %125 = vmatprep.subr.mxu0 0.0
    %126 = vmatpush2.msra.mxu0 0.0
    %127 = vmatprep.subr.mxu0 0.0
    %128 = vmatpush2.msra.mxu0 0.0
    %129 = vmatprep.subr.mxu0 0.0
    %130 = vmatpush2.msra.mxu0 0.0
    %131 = vmatprep.subr.mxu0 0.0
    %132 = vmatpush2.msra.mxu0 0.0
    %133 = vmatprep.subr.mxu0 0.0
    %134 = vmatpush2.msra.mxu0 0.0
    %135 = vmatprep.subr.mxu0 0.0
    %136 = vmatpush2.msra.mxu0 0.0
    %137 = vmatprep.subr.mxu0 0.0
    %138 = vmatpush2.msra.mxu0 0.0
    %139 = vmatprep.subr.mxu0 0.0
    %140 = vmatpush2.msra.mxu0 0.0
    %141 = vmatprep.subr.mxu0 0.0
    %142 = vmatpush2.msra.mxu0 0.0
    %143 = vmatprep.subr.mxu0 0.0
    %144 = vmatpush2.msra.mxu0 0.0
    %145 = vmatprep.subr.mxu0 0.0
    %146 = vmatpush2.msra.mxu0 0.0
    %147 = vmatprep.subr.mxu0 0.0
    %148 = vmatpush2.msra.mxu0 0.0
    %149 = vmatprep.subr.mxu0 0.0
    %150 = vmatpush2.msra.mxu0 0.0
    %151 = vmatprep.subr.mxu0 0.0
    %152 = vmatpush2.msra.mxu0 0.0
    %153 = vmatprep.subr.mxu0 0.0
    %154 = vmatpush2.msra.mxu0 0.0
    %155 = vmatprep.subr.mxu0 0.0
    %156 = vmatpush2.msra.mxu0 0.0
    %157 = vmatprep.mubr.f32.mxu0 0.0
    %158 = vmatmul.mubr.f32.gmra.mxu0 %v91
    %v159 = vpop.f32.mrf.mxu0
    %v160 = vadd.f32 %v87, %v159
    %v161 = vpop.f32.mrf.mxu0
    %162 = vdwg.mxu0
    %v163 = vtanh.pop %v160
    %v164 = vld [vmem:[#allocation6] sm:$0xff]
    %v165 = vld [vmem:[#allocation6 + $0x8] sm:$0xff]
    %v166 = vld [vmem:[#allocation6 + $0x10] sm:$0xff]
    %v167 = vld [vmem:[#allocation6 + $0x18] sm:$0xff]
    %v168 = vld [vmem:[#allocation6 + $0x20] sm:$0xff]
    %v169 = vld [vmem:[#allocation6 + $0x28] sm:$0xff]
    %v170 = vld [vmem:[#allocation6 + $0x30] sm:$0xff]
    %v171 = vld [vmem:[#allocation6 + $0x38] sm:$0xff]
    %v172 = vld [vmem:[#allocation6 + $0x40] sm:$0xff]
    %v173 = vld [vmem:[#allocation6 + $0x48] sm:$0xff]
    %v174 = vld [vmem:[#allocation6 + $0x50] sm:$0xff]
    %v175 = vld [vmem:[#allocation6 + $0x58] sm:$0xff]
    %v176 = vld [vmem:[#allocation6 + $0x60] sm:$0xff]
    %v177 = vld [vmem:[#allocation6 + $0x68] sm:$0xff]
    %v178 = vld [vmem:[#allocation6 + $0x70] sm:$0xff]
    %v179 = vld [vmem:[#allocation6 + $0x78] sm:$0xff]
    %v180 = vld [vmem:[%s4] sm:$0x1]
    %v182 = vlaneseq
    %v183 = vshrl.u32 %v182, 7
    %v184 = vsub.s32 0, %v183
    %v185 = vrot.slane %v180, %v184
    %187 = vmatprep.subr.mxu0 0.0
    %188 = vmatpush1.msra.mxu0 %v179
    %189 = vmatprep.subr.mxu0 0.0
    %190 = vmatpush1.msra.mxu0 %v178
    %191 = vmatprep.subr.mxu0 0.0
    %192 = vmatpush1.msra.mxu0 %v177
    %193 = vmatprep.subr.mxu0 0.0
    %194 = vmatpush1.msra.mxu0 %v176
    %195 = vmatprep.subr.mxu0 0.0
    %196 = vmatpush1.msra.mxu0 %v175
    %197 = vmatprep.subr.mxu0 0.0
    %198 = vmatpush1.msra.mxu0 %v174
    %199 = vmatprep.subr.mxu0 0.0
    %200 = vmatpush1.msra.mxu0 %v173
    %201 = vmatprep.subr.mxu0 0.0
    %202 = vmatpush1.msra.mxu0 %v172
    %203 = vmatprep.subr.mxu0 0.0
    %204 = vmatpush1.msra.mxu0 %v171
    %205 = vmatprep.subr.mxu0 0.0
    %206 = vmatpush1.msra.mxu0 %v170
    %207 = vmatprep.subr.mxu0 0.0
    %208 = vmatpush1.msra.mxu0 %v169
    %209 = vmatprep.subr.mxu0 0.0
    %210 = vmatpush1.msra.mxu0 %v168
    %211 = vmatprep.subr.mxu0 0.0
    %212 = vmatpush1.msra.mxu0 %v167
    %213 = vmatprep.subr.mxu0 0.0
    %214 = vmatpush1.msra.mxu0 %v166
    %215 = vmatprep.subr.mxu0 0.0
    %216 = vmatpush1.msra.mxu0 %v165
    %217 = vmatprep.subr.mxu0 0.0
    %218 = vmatpush1.msra.mxu0 %v164
    %219 = vmatprep.subr.mxu0 0.0
    %220 = vmatpush2.msra.mxu0 0.0
    %221 = vmatprep.subr.mxu0 0.0
    %222 = vmatpush2.msra.mxu0 0.0
    %223 = vmatprep.subr.mxu0 0.0
    %224 = vmatpush2.msra.mxu0 0.0
    %225 = vmatprep.subr.mxu0 0.0
    %226 = vmatpush2.msra.mxu0 0.0
    %227 = vmatprep.subr.mxu0 0.0
    %228 = vmatpush2.msra.mxu0 0.0
    %229 = vmatprep.subr.mxu0 0.0
    %230 = vmatpush2.msra.mxu0 0.0
    %231 = vmatprep.subr.mxu0 0.0
    %232 = vmatpush2.msra.mxu0 0.0
    %233 = vmatprep.subr.mxu0 0.0
    %234 = vmatpush2.msra.mxu0 0.0
    %235 = vmatprep.subr.mxu0 0.0
    %236 = vmatpush2.msra.mxu0 0.0
    %237 = vmatprep.subr.mxu0 0.0
    %238 = vmatpush2.msra.mxu0 0.0
    %239 = vmatprep.subr.mxu0 0.0
    %240 = vmatpush2.msra.mxu0 0.0
    %241 = vmatprep.subr.mxu0 0.0
    %242 = vmatpush2.msra.mxu0 0.0
    %243 = vmatprep.subr.mxu0 0.0
    %244 = vmatpush2.msra.mxu0 0.0
    %245 = vmatprep.subr.mxu0 0.0
    %246 = vmatpush2.msra.mxu0 0.0
    %247 = vmatprep.subr.mxu0 0.0
    %248 = vmatpush2.msra.mxu0 0.0
    %249 = vmatprep.subr.mxu0 0.0
    %250 = vmatpush2.msra.mxu0 0.0
    %251 = vmatprep.mubr.f32.mxu0 0.0
    %252 = vmatmul.mubr.f32.gmra.mxu0 %v163
    %v253 = vpop.f32.mrf.mxu0
    %v254 = vadd.f32 %v185, %v253
    %v255 = vpop.f32.mrf.mxu0
    %256 = vdwg.mxu0
    %v257 = vtanh.pop %v254
    %v258 = vld [vmem:[#allocation7] sm:$0xff]
    %v259 = vld [vmem:[#allocation7 + $0x8] sm:$0xff]
    %v260 = vld [vmem:[#allocation7 + $0x10] sm:$0xff]
    %v261 = vld [vmem:[#allocation7 + $0x18] sm:$0xff]
    %v262 = vld [vmem:[#allocation7 + $0x20] sm:$0xff]
    %v263 = vld [vmem:[#allocation7 + $0x28] sm:$0xff]
    %v264 = vld [vmem:[#allocation7 + $0x30] sm:$0xff]
    %v265 = vld [vmem:[#allocation7 + $0x38] sm:$0xff]
    %v266 = vld [vmem:[#allocation7 + $0x40] sm:$0xff]
    %v267 = vld [vmem:[#allocation7 + $0x48] sm:$0xff]
    %v268 = vld [vmem:[#allocation7 + $0x50] sm:$0xff]
    %v269 = vld [vmem:[#allocation7 + $0x58] sm:$0xff]
    %v270 = vld [vmem:[#allocation7 + $0x60] sm:$0xff]
    %v271 = vld [vmem:[#allocation7 + $0x68] sm:$0xff]
    %v272 = vld [vmem:[#allocation7 + $0x70] sm:$0xff]
    %v273 = vld [vmem:[#allocation7 + $0x78] sm:$0xff]
    %v274 = vld [vmem:[%s6] sm:$0x1]
    %v276 = vlaneseq
    %v277 = vshrl.u32 %v276, 7
    %v278 = vsub.s32 0, %v277
    %v279 = vrot.slane %v274, %v278
    %281 = vmatprep.subr.mxu0 0.0
    %282 = vmatpush1.msra.mxu0 %v273
    %283 = vmatprep.subr.mxu0 0.0
    %284 = vmatpush1.msra.mxu0 %v272
    %285 = vmatprep.subr.mxu0 0.0
    %286 = vmatpush1.msra.mxu0 %v271
    %287 = vmatprep.subr.mxu0 0.0
    %288 = vmatpush1.msra.mxu0 %v270
    %289 = vmatprep.subr.mxu0 0.0
    %290 = vmatpush1.msra.mxu0 %v269
    %291 = vmatprep.subr.mxu0 0.0
    %292 = vmatpush1.msra.mxu0 %v268
    %293 = vmatprep.subr.mxu0 0.0
    %294 = vmatpush1.msra.mxu0 %v267
    %295 = vmatprep.subr.mxu0 0.0
    %296 = vmatpush1.msra.mxu0 %v266
    %297 = vmatprep.subr.mxu0 0.0
    %298 = vmatpush1.msra.mxu0 %v265
    %299 = vmatprep.subr.mxu0 0.0
    %300 = vmatpush1.msra.mxu0 %v264
    %301 = vmatprep.subr.mxu0 0.0
    %302 = vmatpush1.msra.mxu0 %v263
    %303 = vmatprep.subr.mxu0 0.0
    %304 = vmatpush1.msra.mxu0 %v262
    %305 = vmatprep.subr.mxu0 0.0
    %306 = vmatpush1.msra.mxu0 %v261
    %307 = vmatprep.subr.mxu0 0.0
    %308 = vmatpush1.msra.mxu0 %v260
    %309 = vmatprep.subr.mxu0 0.0
    %310 = vmatpush1.msra.mxu0 %v259
    %311 = vmatprep.subr.mxu0 0.0
    %312 = vmatpush1.msra.mxu0 %v258
    %313 = vmatprep.subr.mxu0 0.0
    %314 = vmatpush2.msra.mxu0 0.0
    %315 = vmatprep.subr.mxu0 0.0
    %316 = vmatpush2.msra.mxu0 0.0
    %317 = vmatprep.subr.mxu0 0.0
    %318 = vmatpush2.msra.mxu0 0.0
    %319 = vmatprep.subr.mxu0 0.0
    %320 = vmatpush2.msra.mxu0 0.0
    %321 = vmatprep.subr.mxu0 0.0
    %322 = vmatpush2.msra.mxu0 0.0
    %323 = vmatprep.subr.mxu0 0.0
    %324 = vmatpush2.msra.mxu0 0.0
    %325 = vmatprep.subr.mxu0 0.0
    %326 = vmatpush2.msra.mxu0 0.0
    %327 = vmatprep.subr.mxu0 0.0
    %328 = vmatpush2.msra.mxu0 0.0
    %329 = vmatprep.subr.mxu0 0.0
    %330 = vmatpush2.msra.mxu0 0.0
    %331 = vmatprep.subr.mxu0 0.0
    %332 = vmatpush2.msra.mxu0 0.0
    %333 = vmatprep.subr.mxu0 0.0
    %334 = vmatpush2.msra.mxu0 0.0
    %335 = vmatprep.subr.mxu0 0.0
    %336 = vmatpush2.msra.mxu0 0.0
    %337 = vmatprep.subr.mxu0 0.0
    %338 = vmatpush2.msra.mxu0 0.0
    %339 = vmatprep.subr.mxu0 0.0
    %340 = vmatpush2.msra.mxu0 0.0
    %341 = vmatprep.subr.mxu0 0.0
    %342 = vmatpush2.msra.mxu0 0.0
    %343 = vmatprep.subr.mxu0 0.0
    %344 = vmatpush2.msra.mxu0 0.0
    %345 = vmatprep.mubr.f32.mxu0 0.0
    %346 = vmatmul.mubr.f32.gmra.mxu0 %v257
    %v347 = vpop.f32.mrf.mxu0
    %v348 = vadd.f32 %v279, %v347
    %v349 = vpop.f32.mrf.mxu0
    %350 = vdwg.mxu0
    %351 = vst [vmem:[%s7] sm:$0xff] %v348
    // Predicated region
    $region46: #{mlp3_forward.1} parent=1 // pred_check
      _
    $region47: #{mlp3_forward.1} parent=1 // pred_check_branch
      %353 = sbr.rel (0) target = $region49
    $region48: #{mlp3_forward.1} parent=1 // pred_region
      _
    $region49: #{mlp3_forward.1} parent=1 // pred_fallthru
      _
    // Predicated region
    $region50: #{mlp3_forward.1} parent=1 // pred_check
      _
    $region51: #{mlp3_forward.1} parent=1 // pred_check_branch
      %355 = sbr.rel (0) target = $region53
    $region52: #{mlp3_forward.1} parent=1 // pred_region
      _
    $region53: #{mlp3_forward.1} parent=1 // pred_fallthru
      _
    %356 = vsyncpa [#allocation3], 1
    %357 = vsyncpa [#allocation5], 1
    %358 = vsyncpa [#allocation8], 1

</llo_original>
